<compile_context>
chip_gen: v5e
topology: v5e:2x2
jax: 0.10.0
libtpu: 0.0.40
codegen_flags: <defaults>
</compile_context>

<pallas_src>
import functools

import numpy as np
import jax
import jax.numpy as jnp
from jax.experimental import pallas as pl
from jax.experimental.pallas import tpu as pltpu

SELU_ALPHA = 1.6732632423543772
SELU_SCALE = 1.0507009873554805
K = 5          # conv kernel size
PAD = 1        # conv padding
N_LAYERS = 5


def _selu(x):
    # scale * (max(0,x) + alpha*(exp(min(0,x)) - 1))   (exp arg clamped <= 0)
    return SELU_SCALE * (jnp.maximum(x, 0.0)
                         + SELU_ALPHA * (jnp.exp(jnp.minimum(x, 0.0)) - 1.0))


@functools.lru_cache(maxsize=None)
def _roll_shift_mul():
    """Resolve pltpu.roll's rotation convention once with a tiny probe kernel.

    Returns m such that, for a static offset d and lane count n,
        pltpu.roll(x, shift=(m * d) % n, axis=1)[..., i] == x[..., (i + d) % n]
    (np.roll convention -> m = -1; "shift-left" convention -> m = +1).
    """
    def probe(x_ref, o_ref):
        o_ref[...] = pltpu.roll(x_ref[...], shift=1, axis=1)

    x = jax.lax.broadcasted_iota(jnp.float32, (8, 128), 1)
    y = pl.pallas_call(
        probe, out_shape=jax.ShapeDtypeStruct((8, 128), jnp.float32))(x)
    return -1 if float(y[0, 0]) == 127.0 else 1


def _critic_fused_kernel(stt_ref, m_ref, p_ref,
                         w0, b0, w1, b1, w2, b2, w3, b3, w4, b4,
                         o_ref, *, wg, n_pad, roll_mul):
    """All 5 conv(+SELU) layers + final spatial sum for ONE batch element.

    stt_ref: [1, 2h, S+T] f32   block-diagonal [src_cf | 0 ; 0 | trn_cf]
    m_ref  : [5, 1, n_pad] f32  per-layer 0/1 valid-region masks (0 beyond n)
    p_ref  : [S+T, n_pad] f32   0/1 placement matrix -> zero-ringed canvas
    wI     : [25, Cout, Cin] bf16  conv taps, tap index k = ky*5 + kx
    bI     : [Cout, 1] f32
    o_ref  : [1, 1, 1] f32      per-batch Wasserstein estimate

    Taps are circular lane rolls of the (S+2)x(T+2)-canvas-flattened
    activation.  For every position kept by m_ref[li] (rows/cols >= 2+li from
    the border) the 5x5 window stays inside the canvas, so the roll never
    wraps there; wrapped/cross-row garbage lands only on masked positions
    (and is finite), so masking both crops the conv and recreates the next
    layer's zero padding.
    """
    # layer-0 input: one tiny MXU matmul places source rows / translation
    # columns onto the zero-ringed, lane-padded canvas (no gather, no reshape)
    x = jnp.dot(stt_ref[0], p_ref[...], preferred_element_type=jnp.float32)

    layers = ((w0, b0), (w1, b1), (w2, b2), (w3, b3), (w4, b4))
    for li, (w_ref, b_ref) in enumerate(layers):
        cout = w_ref.shape[1]
        xb = x.astype(jnp.bfloat16)          # cast once/layer; rolls+MXU bf16
        acc = jnp.zeros((cout, n_pad), jnp.float32)
        for k in range(K * K):
            ky, kx = divmod(k, K)
            d = (ky - 2) * wg + (kx - 2)     # flattened 2-D tap offset
            tap = xb if d == 0 else pltpu.roll(
                xb, shift=(roll_mul * d) % n_pad, axis=1)
            acc = acc + jnp.dot(w_ref[k], tap,
                                preferred_element_type=jnp.float32)
        acc = acc + b_ref[...]               # bias (f32, lane broadcast)
        if li < N_LAYERS - 1:
            acc = _selu(acc)                 # f32 elementwise (v5e-safe)
        x = acc * m_ref[li]                  # crop + recreate next zero pad
    # x: [1, n_pad], already masked -> spatial sum = Wasserstein estimate
    o_ref[...] = jnp.broadcast_to(jnp.sum(x), (1, 1, 1))


def critic_forward(params, source, translation,
                   source_mask=None, translation_mask=None):
    """source: [B, S, h], translation: [B, T, h]  ->  [B]."""
    h = params["h_size"]
    # PyTorch masked_fill_(mask, 0): positions where mask is True are zeroed.
    if translation_mask is not None:
        translation = jnp.where(translation_mask[:, :, None], 0.0, translation)
    if source_mask is not None:
        source = jnp.where(source_mask[:, :, None], 0.0, source)

    B, S, _ = source.shape
    T = translation.shape[1]
    assert S > 2 * N_LAYERS and T > 2 * N_LAYERS, "spatial dims must exceed 10"

    hg, wg = S + 2 * PAD, T + 2 * PAD                 # fixed padded canvas
    n = hg * wg
    n_pad = pl.cdiv(n, 128) * 128                     # lane-dense extent

    # ---- glue (tiny, pure data movement): block-diagonal seq input so the
    # kernel builds the padded interaction canvas with ONE small matmul.
    src_cf = jnp.transpose(source, (0, 2, 1)).astype(jnp.float32)      # [B,h,S]
    trn_cf = jnp.transpose(translation, (0, 2, 1)).astype(jnp.float32)  # [B,h,T]
    stt = jnp.concatenate(
        [jnp.concatenate([src_cf, jnp.zeros((B, h, T), jnp.float32)], axis=2),
         jnp.concatenate([jnp.zeros((B, h, S), jnp.float32), trn_cf], axis=2)],
        axis=1)                                                        # [B,2h,S+T]

    # ---- constant 0/1 placement matrix [S+T, n_pad]:
    #  row r0 (<S): canvas (r0+1, c), c in [1,T]  (source feature broadcast)
    #  row S+c0   : canvas (r, c0+1), r in [1,S]  (translation feature bcast)
    p_np = np.zeros((S + T, n_pad), np.float32)
    for r0 in range(S):
        p_np[r0, (r0 + 1) * wg + 1:(r0 + 1) * wg + 1 + T] = 1.0
    for c0 in range(T):
        p_np[S + c0, wg + (c0 + 1):S * wg + (c0 + 1) + 1:wg] = 1.0
    placement = jnp.asarray(p_np)

    # ---- per-layer valid-output masks on the fixed canvas (zero beyond n)
    masks_np = np.zeros((N_LAYERS, 1, n_pad), np.float32)
    for li in range(N_LAYERS):
        m2 = np.zeros((hg, wg), np.float32)
        m2[2 + li:S - li, 2 + li:T - li] = 1.0        # rows/cols [2+li, S-1-li]
        masks_np[li, 0, :n] = m2.reshape(-1)
    masks = jnp.asarray(masks_np)

    # ---- weights [Cout, Cin, 5, 5] -> [25, Cout, Cin], bf16 (MXU-native);
    # biases stay f32 (accumulate/bias/SELU/mask all in f32).
    w_taps, b_cols = [], []
    for w, b in zip(params["weights"], params["biases"]):
        cout, cin = w.shape[0], w.shape[1]
        w_taps.append(jnp.transpose(w, (2, 3, 0, 1))
                      .reshape(K * K, cout, cin).astype(jnp.bfloat16))
        b_cols.append(b.reshape(cout, 1).astype(jnp.float32))

    in_specs = [
        pl.BlockSpec((1, 2 * h, S + T), lambda i: (i, 0, 0)),      # stt
        pl.BlockSpec((N_LAYERS, 1, n_pad), lambda i: (0, 0, 0)),   # masks
        pl.BlockSpec((S + T, n_pad), lambda i: (0, 0)),            # placement
    ]
    operands = [stt, masks, placement]
    for wt, bc in zip(w_taps, b_cols):
        in_specs.append(pl.BlockSpec(wt.shape, lambda i: (0, 0, 0)))
        in_specs.append(pl.BlockSpec(bc.shape, lambda i: (0, 0)))
        operands.extend([wt, bc])

    kernel = functools.partial(_critic_fused_kernel, wg=wg, n_pad=n_pad,
                               roll_mul=_roll_shift_mul())
    out = pl.pallas_call(
        kernel,
        out_shape=jax.ShapeDtypeStruct((B, 1, 1), jnp.float32),
        grid=(B,),
        in_specs=in_specs,
        out_specs=pl.BlockSpec((1, 1, 1), lambda i: (i, 0, 0)),
        compiler_params=pltpu.CompilerParams(
            dimension_semantics=("parallel",),
            vmem_limit_bytes=32 * 1024 * 1024),     # explicit, v7x-safe budget
    )(*operands)
    return out[:, 0, 0]


def init_params(key, h_size):
    """Deterministic synthetic init (PyTorch-default-style uniform bounds)."""
    layer_dims = [(2 * h_size, 2 * h_size),
                  (2 * h_size, h_size),
                  (h_size, h_size),
                  (h_size, h_size),
                  (h_size, 1)]
    weights, biases = [], []
    for cin, cout in layer_dims:
        key, kw, kb = jax.random.split(key, 3)
        bound = 1.0 / float(cin * K * K) ** 0.5
        weights.append(jax.random.uniform(kw, (cout, cin, K, K),
                                          jnp.float32, -bound, bound))
        biases.append(jax.random.uniform(kb, (cout,),
                                         jnp.float32, -bound, bound))
    return {"h_size": h_size, "weights": weights, "biases": biases}


def critic_reference(params, source, translation):
    """Pure-JAX (XLA conv, f32) reference of the same forward pass."""
    h = params["h_size"]
    B, S, _ = source.shape
    T = translation.shape[1]
    src = jnp.broadcast_to(source[:, None, :, :], (B, T, S, h))
    trn = jnp.broadcast_to(translation[:, :, None, :], (B, T, S, h))
    x = jnp.concatenate([src, trn], axis=3).transpose(0, 3, 2, 1)  # [B,2h,S,T]
    for i in range(N_LAYERS):
        x = jax.lax.conv_general_dilated(
            x, params["weights"][i], (1, 1), ((PAD, PAD), (PAD, PAD)),
            dimension_numbers=("NCHW", "OIHW", "NCHW"),
            precision=jax.lax.Precision.HIGHEST)
        x = x + params["biases"][i][None, :, None, None]
        if i < N_LAYERS - 1:
            x = _selu(x)
    return x[:, 0].sum(axis=(1, 2))


if __name__ == "__main__":
    key = jax.random.PRNGKey(0)
    h_size = 8
    B, S, T = 2, 16, 16      # spatial must exceed 10 (5 convs shrink by 2 each)

    k_src, k_trn, k_par = jax.random.split(key, 3)
    source = jax.random.normal(k_src, (B, S, h_size), jnp.float32)
    translation = jax.random.normal(k_trn, (B, T, h_size), jnp.float32)
    params = init_params(k_par, h_size)

    out = critic_forward(params, source, translation)
    out = jax.block_until_ready(out)
    assert out.shape == (B,), out.shape
    assert bool(jnp.all(jnp.isfinite(out)))

    # cross-check: kernel uses bf16 MXU operands (f32 accumulate); the
    # reference is pure f32 XLA conv, hence the loosened tolerance.
    ref = jax.block_until_ready(critic_reference(params, source, translation))
    np.testing.assert_allclose(np.asarray(out), np.asarray(ref),
                               rtol=5e-2, atol=2e-1)

    print("KERNEL_OK")
</pallas_src>

<mosaic_0001>
module attributes {stable_mosaic.version = 11 : i64} {
  func.func @probe(%arg0: memref<8x128xf32, #tpu.memory_space<vmem>>, %arg1: memref<8x128xf32, #tpu.memory_space<vmem>>) attributes {dimension_semantics = [], scalar_prefetch = 0 : i64, scratch_operands = 0 : i64, tpu.core_type = #tpu.core_type<tc>} {
    %c0 = arith.constant 0 : index
    %c0_0 = arith.constant 0 : index
    %0 = vector.load %arg0[%c0, %c0_0] : memref<8x128xf32, #tpu.memory_space<vmem>>, vector<8x128xf32>
    %c1_i32 = arith.constant 1 : i32
    %1 = tpu.dynamic_rotate %0 by %c1_i32 dim 1 : vector<8x128xf32>, i32 -> vector<8x128xf32>
    %c0_1 = arith.constant 0 : index
    %c0_2 = arith.constant 0 : index
    %2 = vector.load %arg1[%c0_1, %c0_2] : memref<8x128xf32, #tpu.memory_space<vmem>>, vector<8x128xf32>
    tpu.vector_store %arg1[%c0_1, %c0_2], %1 {strides = array<i32>} : memref<8x128xf32, #tpu.memory_space<vmem>>, vector<8x128xf32>,
    return
  }
}

</mosaic_0001>

<llo_original>
// kernel: tpu_custom_call.1
$region0: #{tpu_custom_call.1}
  #allocation0 [shape = 'u32[]', space=smem, size = 0x4, offset = 0x4, fixed_abs, tag = 'smem constant byte address 0x4 - core index']
  #allocation1 [shape = 'u32[72,128]{1,0:T(1,128)}', space=vmem, size = 0x9000, scoped, tag = 'internal scratch']
  %s0 = inlined_call_operand.hbm [shape: f32[8,128], index: 0, kind: input, shape index: {}]
  %s1 = inlined_call_operand.hbm [shape: f32[8,128], index: 1, kind: output, shape index: {}]
  %s2 = sld [smem:[#allocation0]]
  $region18: #{tpu_custom_call.1} parent=0
    _
  %s4 = ssub.s32 1, %s2
  %s5 = scalar_select 0, %s4, %s2
  $region1: #{tpu_custom_call.1} parent=0
    #allocation2 [shape = 'u8[4096]{0}', space=vmem, size = 0x1000, scoped, tag = 'input window, operand 0, single buffered']
    #allocation3 [shape = 's32[1]{0}', space=sflag, size = 0x4, scoped, tag = 'scoped memory for tpu_custom_call.1']
    #allocation4 [shape = 's32[1]{0}', space=sflag, size = 0x4, scoped, tag = 'scoped memory for tpu_custom_call.1']
    #allocation5 [shape = 'u8[4096]{0}', space=vmem, size = 0x1000, scoped, tag = 'output window, operand 0, single buffered']
    %6 = vsyncpa [#allocation3], 0
    %7 = vsyncpa [#allocation4], 0
    // Predicated region
    $region2: #{tpu_custom_call.1} parent=1 // pred_check
      _
    $region3: #{tpu_custom_call.1} parent=1 // pred_check_branch
      %9 = sbr.rel (0) target = $region5
    $region4: #{tpu_custom_call.1} parent=1 // pred_region
      %11 = vsyncadd [#allocation3], 0
      %s13 = sshll.u32 %s0, 4
      %s14 = int_to_ptr.hbm [resolvable:$true] %s13
      %s15 = sshll.u32 [#allocation2], 4
      %s16 = int_to_ptr.vmem [resolvable:$true] %s15
      %18 = dma.hbm_to_vmem [thread:$0]  %s14, 128, %s16, [#allocation3]
    $region5: #{tpu_custom_call.1} parent=1 // pred_fallthru
      _
    // Predicated region
    $region6: #{tpu_custom_call.1} parent=1 // pred_check
      _
    $region7: #{tpu_custom_call.1} parent=1 // pred_check_branch
      %20 = sbr.rel (0) target = $region9
    $region8: #{tpu_custom_call.1} parent=1 // pred_region
      %22 = dma.done [#allocation3], 128
    $region9: #{tpu_custom_call.1} parent=1 // pred_fallthru
      _
    %v23 = vld [vmem:[#allocation2] sm:$0xff]
    %24 = vrot.lane.b32.xlu0 %v23, 1
    %v25 = vpop.permute.xlu0 %24
    %26 = vst [vmem:[#allocation5] sm:$0xff] %v25
    // Predicated region
    $region10: #{tpu_custom_call.1} parent=1 // pred_check
      _
    $region11: #{tpu_custom_call.1} parent=1 // pred_check_branch
      %28 = sbr.rel (0) target = $region13
    $region12: #{tpu_custom_call.1} parent=1 // pred_region
      %30 = vsyncadd [#allocation4], 0
      %s32 = sshll.u32 [#allocation5], 4
      %s33 = int_to_ptr.vmem [resolvable:$true] %s32
      %s34 = sshll.u32 %s1, 4
      %s35 = int_to_ptr.hbm [resolvable:$true] %s34
      %37 = dma.vmem_to_hbm [thread:$0]  %s33, 128, %s35, [#allocation4]
    $region13: #{tpu_custom_call.1} parent=1 // pred_fallthru
      _
    // Predicated region
    $region14: #{tpu_custom_call.1} parent=1 // pred_check
      _
    $region15: #{tpu_custom_call.1} parent=1 // pred_check_branch
      %39 = sbr.rel (0) target = $region17
    $region16: #{tpu_custom_call.1} parent=1 // pred_region
      %41 = dma.done [#allocation4], 128
    $region17: #{tpu_custom_call.1} parent=1 // pred_fallthru
      _
    %42 = vsyncpa [#allocation3], 1
    %43 = vsyncpa [#allocation4], 1

</llo_original>
